<compile_context>
chip_gen: v7x
topology: tpu7x:2x2x1
jax: 0.10.0
libtpu: 0.0.40
codegen_flags: <defaults>
</compile_context>

<pallas_src>
import jax
import jax.numpy as jnp
from jax.experimental import pallas as pl
from jax.experimental.pallas import tpu as pltpu

LN_EPS = 1e-5  # nn.LayerNorm default

_LANE = 128
_SUBLANE = 8
_TILE_M_TARGET = 1024                  # 512-1024 row tiles ~ HBM roofline sweet spot
_VMEM_LIMIT_BYTES = 48 * 1024 * 1024   # > v5e/v6e scoped defaults, < v7x 64 MiB physical
_VMEM_BLOCK_BUDGET = 32 * 1024 * 1024  # budget for the double-buffered in/out blocks


def _round_up(x, m):
    return (x + m - 1) // m * m


def _cdiv(a, b):
    return -(-a // b)


# ---------------------------------------------------------------------------
# Pallas kernel: fused LayerNorm (over 8C) + matmul (8C -> 2C, no bias)
# ---------------------------------------------------------------------------
def _norm_reduce_kernel(x_ref, gamma_ref, beta_ref, w_ref, o_ref):
    # x_ref:     (TM, 8C)   merged features for TM tokens
    # gamma_ref: (1, 8C)    LayerNorm weight
    # beta_ref:  (1, 8C)    LayerNorm bias
    # w_ref:     (8C, 2C)   reduction weight (already transposed: x @ W)
    # o_ref:     (TM, 2C)
    x = x_ref[...].astype(jnp.float32)

    mean = jnp.mean(x, axis=-1, keepdims=True)
    centered = x - mean
    var = jnp.mean(centered * centered, axis=-1, keepdims=True)
    inv = jax.lax.rsqrt(var + LN_EPS)
    xn = centered * inv
    xn = xn * gamma_ref[...].astype(jnp.float32) + beta_ref[...].astype(jnp.float32)

    # Kept in f32 to match nn.LayerNorm/nn.Linear numerics bit-for-bit; the
    # kernel is HBM-bound so the MXU dtype is not the bottleneck here.
    out = jnp.dot(xn, w_ref[...].astype(jnp.float32),
                  preferred_element_type=jnp.float32)

    # TODO(synk): when 2C < 128, packing the output into 128-wide lanes
    # ((TM, 2C) -> (TM*2C/128, 128)) would avoid masked vst's; skipped because
    # the in-kernel lane-folding relayout is not guaranteed to lower on all
    # toolchains and the HBM-side store is already a contiguous full-width block.
    o_ref[...] = out.astype(o_ref.dtype)


# ---------------------------------------------------------------------------
# Tile selection: biggest row tile that fits the VMEM budget, >= 2 grid steps
# (so v7x megacore can shard the parallel axis), rows padded to fit exactly.
# ---------------------------------------------------------------------------
def _pick_tile(n_rows, c8, c2):
    in_cols = _round_up(c8, _LANE)
    out_cols = _round_up(c2, _LANE)
    bytes_per_row = 2 * (in_cols + out_cols) * 4            # double-buffered blocks, f32
    param_bytes = 2 * (2 * in_cols + c8 * out_cols) * 4     # gamma/beta/W (double-buffered)
    budget = max(_VMEM_BLOCK_BUDGET - param_bytes, 1 << 20)

    cap = max(budget // bytes_per_row, _SUBLANE)
    cap = max(min(cap - cap % _SUBLANE, _TILE_M_TARGET), _SUBLANE)

    n8 = _round_up(n_rows, _SUBLANE)
    num_steps = max(_cdiv(n8, cap), 1)
    if num_steps == 1 and n8 >= 2 * _SUBLANE:
        num_steps = 2  # keep >=2 parallel grid steps so both v7x cores get work
    tile_m = _round_up(_cdiv(n_rows, num_steps), _SUBLANE)
    return tile_m, num_steps


def _fused_norm_reduce(x2d, gamma, beta, w, *, tile_m, grid_steps):
    """x2d: (N_pad, 8C) -> (N_pad, 2C)  (LayerNorm then bias-free linear)."""
    n_pad, c8 = x2d.shape
    c2 = w.shape[1]
    assert n_pad == tile_m * grid_steps, (n_pad, tile_m, grid_steps)

    itemsize = jnp.dtype(x2d.dtype).itemsize
    flops = 2 * n_pad * c8 * c2 + 10 * n_pad * c8
    bytes_accessed = (n_pad * (c8 + c2) + c8 * c2 + 2 * c8) * itemsize

    return pl.pallas_call(
        _norm_reduce_kernel,
        out_shape=jax.ShapeDtypeStruct((n_pad, c2), x2d.dtype),
        grid_spec=pltpu.PrefetchScalarGridSpec(
            num_scalar_prefetch=0,
            grid=(grid_steps,),
            in_specs=[
                pl.BlockSpec((tile_m, c8), lambda i: (i, 0)),
                pl.BlockSpec((1, c8), lambda i: (0, 0)),
                pl.BlockSpec((1, c8), lambda i: (0, 0)),
                pl.BlockSpec((c8, c2), lambda i: (0, 0)),
            ],
            out_specs=pl.BlockSpec((tile_m, c2), lambda i: (i, 0)),
        ),
        compiler_params=pltpu.CompilerParams(
            dimension_semantics=("parallel",),
            # Let XLA fuse the 2x2x2 rearrange (reshape/transpose/pad producer)
            # into this operand's input pipeline instead of materializing it.
            allow_input_fusion=[True, False, False, False],
            vmem_limit_bytes=_VMEM_LIMIT_BYTES,
        ),
        cost_estimate=pl.CostEstimate(
            flops=flops, transcendentals=n_pad, bytes_accessed=bytes_accessed),
    )(x2d, gamma, beta, w)


# ---------------------------------------------------------------------------
# Full PatchMerging3D forward
# ---------------------------------------------------------------------------
def patch_merging_3d(x, input_resolution, params):
    """x: (B, L, C) with L = D*H*W.  Returns (B, L/8, 2C)."""
    D, H, W = input_resolution
    B, L, C = x.shape
    assert L == D * H * W, "input feature has wrong size"
    assert D % 2 == 0 and H % 2 == 0 and W % 2 == 0, "sizes must be even"

    # 2x2x2 patch-merging rearrangement.  Column chunk order matches the
    # torch.cat([x0..x7]) order: chunk index = 4*w_parity + 2*h_parity + d_parity.
    xv = x.reshape(B, D // 2, 2, H // 2, 2, W // 2, 2, C)
    #            (B,  dD,  dp,  hH,  hp,  wW,  wp, C)
    xv = jnp.transpose(xv, (0, 1, 3, 5, 6, 4, 2, 7))
    #            (B, dD, hH, wW, wp, hp, dp, C)
    Lp = (D // 2) * (H // 2) * (W // 2)
    n = B * Lp
    x8 = xv.reshape(n, 8 * C)

    tile_m, steps = _pick_tile(n, 8 * C, 2 * C)
    n_pad = tile_m * steps
    if n_pad != n:
        # Zero pad rows are benign: LayerNorm of a zero row is finite (eps>0)
        # and the result is sliced off below.
        x8 = jnp.pad(x8, ((0, n_pad - n), (0, 0)))

    out2d = _fused_norm_reduce(
        x8, params["norm_w"], params["norm_b"], params["red_w"],
        tile_m=tile_m, grid_steps=steps)

    if n_pad != n:
        out2d = out2d[:n]
    return out2d.reshape(B, Lp, 2 * C)


# ---------------------------------------------------------------------------
# Pure-JAX reference for validation
# ---------------------------------------------------------------------------
def patch_merging_3d_ref(x, input_resolution, params):
    D, H, W = input_resolution
    B, L, C = x.shape
    xv = x.reshape(B, D // 2, 2, H // 2, 2, W // 2, 2, C)
    xv = jnp.transpose(xv, (0, 1, 3, 5, 6, 4, 2, 7))
    x8 = xv.reshape(B, -1, 8 * C).astype(jnp.float32)
    mean = jnp.mean(x8, axis=-1, keepdims=True)
    var = jnp.mean((x8 - mean) ** 2, axis=-1, keepdims=True)
    xn = (x8 - mean) * jax.lax.rsqrt(var + LN_EPS)
    xn = xn * params["norm_w"][0] + params["norm_b"][0]
    return xn @ params["red_w"]


if __name__ == "__main__":
    # Small shapes consistent with the module: dim=C=16, resolution 8x8x8, B=2
    B = 2
    C = 16
    D = H = W = 8
    L = D * H * W

    key = jax.random.PRNGKey(0)
    kx, kw, kg, kb = jax.random.split(key, 4)

    x = jax.random.normal(kx, (B, L, C), dtype=jnp.float32)

    # Parameters (deterministic init). PyTorch Linear weight is (2C, 8C) and
    # computes x @ W.T; we store the transposed (8C, 2C) matrix directly.
    params = {
        "red_w": (jax.random.normal(kw, (8 * C, 2 * C), dtype=jnp.float32)
                  * (1.0 / jnp.sqrt(8 * C))),
        "norm_w": 1.0 + 0.1 * jax.random.normal(kg, (1, 8 * C), dtype=jnp.float32),
        "norm_b": 0.1 * jax.random.normal(kb, (1, 8 * C), dtype=jnp.float32),
    }

    out = patch_merging_3d(x, (D, H, W), params)
    out = jax.block_until_ready(out)

    ref = patch_merging_3d_ref(x, (D, H, W), params)
    assert out.shape == (B, L // 8, 2 * C), out.shape
    assert jnp.allclose(out, ref, atol=1e-4, rtol=1e-4), (
        float(jnp.max(jnp.abs(out - ref))))

    print("KERNEL_OK")
</pallas_src>

<mosaic_0001>
module attributes {stable_mosaic.version = 11 : i64} {
  func.func @_norm_reduce_kernel(%arg0: i32, %arg1: memref<64x128xf32, #tpu.memory_space<vmem>>, %arg2: memref<1x128xf32, #tpu.memory_space<vmem>>, %arg3: memref<1x128xf32, #tpu.memory_space<vmem>>, %arg4: memref<128x32xf32, #tpu.memory_space<vmem>>, %arg5: memref<64x32xf32, #tpu.memory_space<vmem>>) attributes {dimension_semantics = [#tpu.dimension_semantics<parallel>], iteration_bounds = array<i64: 2>, scalar_prefetch = 0 : i64, scratch_operands = 0 : i64, tpu.core_type = #tpu.core_type<tc>, window_params = [{transform_indices = @transform_0, window_bounds = array<i64: 64, 128>}, {pipeline_mode = #tpu.pipeline_mode<synchronous>, transform_indices = @transform_1, window_bounds = array<i64: 1, 128>}, {pipeline_mode = #tpu.pipeline_mode<synchronous>, transform_indices = @transform_2, window_bounds = array<i64: 1, 128>}, {pipeline_mode = #tpu.pipeline_mode<synchronous>, transform_indices = @transform_3, window_bounds = array<i64: 128, 32>}, {transform_indices = @transform_4, window_bounds = array<i64: 64, 32>}]} {
    %c0 = arith.constant 0 : index
    %c0_0 = arith.constant 0 : index
    %0 = vector.load %arg1[%c0, %c0_0] : memref<64x128xf32, #tpu.memory_space<vmem>>, vector<64x128xf32>
    %cst = arith.constant dense<0.000000e+00> : vector<64xf32>
    %1 = vector.multi_reduction <add>, %0, %cst [1] : vector<64x128xf32> to vector<64xf32>
    %2 = vector.shape_cast %1 : vector<64xf32> to vector<64x1xf32>
    %cst_1 = arith.constant 1.280000e+02 : f32
    %3 = vector.broadcast %cst_1 : f32 to vector<64x1xf32>
    %4 = arith.divf %2, %3 : vector<64x1xf32>
    %5 = vector.broadcast %4 : vector<64x1xf32> to vector<64x128xf32>
    %6 = arith.subf %0, %5 : vector<64x128xf32>
    %7 = arith.mulf %6, %6 : vector<64x128xf32>
    %cst_2 = arith.constant dense<0.000000e+00> : vector<64xf32>
    %8 = vector.multi_reduction <add>, %7, %cst_2 [1] : vector<64x128xf32> to vector<64xf32>
    %9 = vector.shape_cast %8 : vector<64xf32> to vector<64x1xf32>
    %cst_3 = arith.constant 1.280000e+02 : f32
    %10 = vector.broadcast %cst_3 : f32 to vector<64x1xf32>
    %11 = arith.divf %9, %10 : vector<64x1xf32>
    %cst_4 = arith.constant 9.99999974E-6 : f32
    %12 = vector.broadcast %cst_4 : f32 to vector<64x1xf32>
    %13 = arith.addf %11, %12 : vector<64x1xf32>
    %14 = math.rsqrt %13 : vector<64x1xf32>
    %15 = vector.broadcast %14 : vector<64x1xf32> to vector<64x128xf32>
    %16 = arith.mulf %6, %15 : vector<64x128xf32>
    %c0_5 = arith.constant 0 : index
    %c0_6 = arith.constant 0 : index
    %17 = vector.load %arg2[%c0_5, %c0_6] : memref<1x128xf32, #tpu.memory_space<vmem>>, vector<1x128xf32>
    %18 = vector.broadcast %17 : vector<1x128xf32> to vector<64x128xf32>
    %19 = arith.mulf %16, %18 : vector<64x128xf32>
    %c0_7 = arith.constant 0 : index
    %c0_8 = arith.constant 0 : index
    %20 = vector.load %arg3[%c0_7, %c0_8] : memref<1x128xf32, #tpu.memory_space<vmem>>, vector<1x128xf32>
    %21 = vector.broadcast %20 : vector<1x128xf32> to vector<64x128xf32>
    %22 = arith.addf %19, %21 : vector<64x128xf32>
    %c0_9 = arith.constant 0 : index
    %c0_10 = arith.constant 0 : index
    %23 = vector.load %arg4[%c0_9, %c0_10] : memref<128x32xf32, #tpu.memory_space<vmem>>, vector<128x32xf32>
    %cst_11 = arith.constant dense<0.000000e+00> : vector<64x32xf32>
    %24 = tpu.matmul %22, %23, %cst_11 {dimension_numbers = #tpu.dot_dimension_numbers<[1], [0], [0], [1], [0, 0, 1, 1], [], []>} : vector<64x128xf32>, vector<128x32xf32>, vector<64x32xf32> -> vector<64x32xf32>
    %c0_12 = arith.constant 0 : index
    %c0_13 = arith.constant 0 : index
    %25 = vector.load %arg5[%c0_12, %c0_13] : memref<64x32xf32, #tpu.memory_space<vmem>>, vector<64x32xf32>
    tpu.vector_store %arg5[%c0_12, %c0_13], %24 {strides = array<i32>} : memref<64x32xf32, #tpu.memory_space<vmem>>, vector<64x32xf32>,
    return
  }
  func.func @transform_0(%arg0: i32) -> (i32, i32) {
    %c0_i32 = arith.constant 0 : i32
    %c0_i32_0 = arith.constant 0 : i32
    return %arg0, %c0_i32 : i32, i32
  }
  func.func @transform_1(%arg0: i32) -> (i32, i32) {
    %c0_i32 = arith.constant 0 : i32
    %c0_i32_0 = arith.constant 0 : i32
    %c0_i32_1 = arith.constant 0 : i32
    return %c0_i32, %c0_i32_0 : i32, i32
  }
  func.func @transform_2(%arg0: i32) -> (i32, i32) {
    %c0_i32 = arith.constant 0 : i32
    %c0_i32_0 = arith.constant 0 : i32
    %c0_i32_1 = arith.constant 0 : i32
    return %c0_i32, %c0_i32_0 : i32, i32
  }
  func.func @transform_3(%arg0: i32) -> (i32, i32) {
    %c0_i32 = arith.constant 0 : i32
    %c0_i32_0 = arith.constant 0 : i32
    %c0_i32_1 = arith.constant 0 : i32
    return %c0_i32, %c0_i32_0 : i32, i32
  }
  func.func @transform_4(%arg0: i32) -> (i32, i32) {
    %c0_i32 = arith.constant 0 : i32
    %c0_i32_0 = arith.constant 0 : i32
    return %arg0, %c0_i32 : i32, i32
  }
}

</mosaic_0001>

<llo_original>
// kernel: tpu_custom_call.1
$region0: #{tpu_custom_call.1}
  #allocation0 [shape = 'u32[]', space=smem, size = 0x4, offset = 0x4, fixed_abs, tag = 'smem constant byte address 0x4 - core index']
  #allocation1 [shape = 'u32[144,128]{1,0:T(1,128)}', space=vmem, size = 0x12000, scoped, tag = 'internal scratch']
  %s0 = inlined_call_operand.vmem [shape: f32[128,128], index: 0, kind: input, shape index: {}]
  %s1 = inlined_call_operand.vmem [shape: f32[1,128], index: 1, kind: input, shape index: {}]
  %s2 = inlined_call_operand.vmem [shape: f32[1,128], index: 2, kind: input, shape index: {}]
  %s3 = inlined_call_operand.vmem [shape: f32[128,32], index: 3, kind: input, shape index: {}]
  %s4 = inlined_call_operand.vmem [shape: f32[128,32], index: 4, kind: output, shape index: {}]
  %s5 = sld [smem:[#allocation0]]
  $region49: #{tpu_custom_call.1} parent=0
    _
  %s7 = ssub.s32 1, %s5
  %s8 = scalar_select 0, %s7, %s5
  loop: start=0, step=1, limit=4
  $region2: #{tpu_custom_call.1} parent=0 // loop_pre_header
    _
  $region3: #{tpu_custom_call.1} parent=0 // loop_header
    %s10 = sphi 0, %s14
    %p11 = scmp.ge.s32.totalorder %s10, 4
    %s20 = sphi 0, %s22
    %s23 = sphi 0, %s20
    %s24 = sphi 0, %s23
    %s40 = sphi 0, %s24
    %s44 = sphi 0, %s44
    %s46 = sphi 0, %s44
    %s47 = sphi 0, %s46
    %s61 = sphi 0, %s47
    %s65 = sphi 0, %s65
    %s67 = sphi 0, %s65
    %s68 = sphi 0, %s67
    %s82 = sphi 0, %s68
    %s86 = sphi 0, %s86
    %s88 = sphi 0, %s86
    %s89 = sphi 0, %s88
    %s103 = sphi 0, %s89
    %s109 = sphi 0, %s111
    %s112 = sphi 0, %s109
    %s113 = sphi 0, %s112
    %s129 = sphi 0, %s113
  $region4: #{tpu_custom_call.1} parent=0 // loop_header_branch
    %13 = sbr.rel (%p11) target = $region8
  $region5: #{tpu_custom_call.1} parent=0 // loop_body
    %s15 = ssub.s32 %s10, 1
    %s16 = ssub.s32 %s10, 2
    %s17 = sadd.s32 %s10, 1
    %s18 = ssub.s32 %s10, %s17
    %p19 = scmp.eq.s32.totalorder %s18, 0
    %s21 = sadd.s32 %s20, 1
    %s22 = scalar_select %p19, %s20, %s21
    %p25 = pneg %p19
    %p26 = scmp.eq.s32.totalorder %s10, 1
    %p27 = por %p25, %p26
    %p28 = scmp.ne.s32.totalorder %s20, %s23
    %p29 = scmp.eq.s32.totalorder %s10, 0
    %p30 = por %p28, %p29
    %p31 = scmp.ne.s32.totalorder %s20, %s23
    %p32 = scmp.eq.s32.totalorder %s15, 1
    %p33 = por %p31, %p32
    %p34 = scmp.ne.s32.totalorder %s23, %s24
    %p35 = scmp.eq.s32.totalorder %s15, 0
    %p36 = por %p34, %p35
    %p37 = scmp.ne.s32.totalorder %s23, %s24
    %p38 = scmp.eq.s32.totalorder %s16, 1
    %p39 = por %p37, %p38
    %p41 = scmp.ne.s32.totalorder %s24, %s40
    %p42 = scmp.eq.s32.totalorder %s16, 0
    %p43 = por %p41, %p42
    %s45 = sadd.s32 %s44, 1
    %p48 = scmp.eq.s32.totalorder %s10, 1
    %p49 = scmp.ne.s32.totalorder %s44, %s46
    %p50 = scmp.eq.s32.totalorder %s10, 0
    %p51 = por %p49, %p50
    %p52 = scmp.ne.s32.totalorder %s44, %s46
    %p53 = scmp.eq.s32.totalorder %s15, 1
    %p54 = por %p52, %p53
    %p55 = scmp.ne.s32.totalorder %s46, %s47
    %p56 = scmp.eq.s32.totalorder %s15, 0
    %p57 = por %p55, %p56
    %p58 = scmp.ne.s32.totalorder %s46, %s47
    %p59 = scmp.eq.s32.totalorder %s16, 1
    %p60 = por %p58, %p59
    %p62 = scmp.ne.s32.totalorder %s47, %s61
    %p63 = scmp.eq.s32.totalorder %s16, 0
    %p64 = por %p62, %p63
    %s66 = sadd.s32 %s65, 1
    %p69 = scmp.eq.s32.totalorder %s10, 1
    %p70 = scmp.ne.s32.totalorder %s65, %s67
    %p71 = scmp.eq.s32.totalorder %s10, 0
    %p72 = por %p70, %p71
    %p73 = scmp.ne.s32.totalorder %s65, %s67
    %p74 = scmp.eq.s32.totalorder %s15, 1
    %p75 = por %p73, %p74
    %p76 = scmp.ne.s32.totalorder %s67, %s68
    %p77 = scmp.eq.s32.totalorder %s15, 0
    %p78 = por %p76, %p77
    %p79 = scmp.ne.s32.totalorder %s67, %s68
    %p80 = scmp.eq.s32.totalorder %s16, 1
    %p81 = por %p79, %p80
    %p83 = scmp.ne.s32.totalorder %s68, %s82
    %p84 = scmp.eq.s32.totalorder %s16, 0
    %p85 = por %p83, %p84
    %s87 = sadd.s32 %s86, 1
    %p90 = scmp.eq.s32.totalorder %s10, 1
    %p91 = scmp.ne.s32.totalorder %s86, %s88
    %p92 = scmp.eq.s32.totalorder %s10, 0
    %p93 = por %p91, %p92
    %p94 = scmp.ne.s32.totalorder %s86, %s88
    %p95 = scmp.eq.s32.totalorder %s15, 1
    %p96 = por %p94, %p95
    %p97 = scmp.ne.s32.totalorder %s88, %s89
    %p98 = scmp.eq.s32.totalorder %s15, 0
    %p99 = por %p97, %p98
    %p100 = scmp.ne.s32.totalorder %s88, %s89
    %p101 = scmp.eq.s32.totalorder %s16, 1
    %p102 = por %p100, %p101
    %p104 = scmp.ne.s32.totalorder %s89, %s103
    %p105 = scmp.eq.s32.totalorder %s16, 0
    %p106 = por %p104, %p105
    %s107 = ssub.s32 %s10, %s17
    %p108 = scmp.eq.s32.totalorder %s107, 0
    %s110 = sadd.s32 %s109, 1
    %s111 = scalar_select %p108, %s109, %s110
    %p114 = pneg %p108
    %p115 = scmp.eq.s32.totalorder %s10, 1
    %p116 = por %p114, %p115
    %p117 = scmp.ne.s32.totalorder %s109, %s112
    %p118 = scmp.eq.s32.totalorder %s10, 0
    %p119 = por %p117, %p118
    %p120 = scmp.ne.s32.totalorder %s109, %s112
    %p121 = scmp.eq.s32.totalorder %s15, 1
    %p122 = por %p120, %p121
    %p123 = scmp.ne.s32.totalorder %s112, %s113
    %p124 = scmp.eq.s32.totalorder %s15, 0
    %p125 = por %p123, %p124
    %p126 = scmp.ne.s32.totalorder %s112, %s113
    %p127 = scmp.eq.s32.totalorder %s16, 1
    %p128 = por %p126, %p127
    %p130 = scmp.ne.s32.totalorder %s113, %s129
    %p131 = scmp.eq.s32.totalorder %s16, 0
    %p132 = por %p130, %p131
    %p133 = scmp.le.s32.totalorder 1, %s10
    %p134 = scmp.lt.s32.totalorder %s10, 3
    %p135 = pnand %p133, %p134
    %p136 = pneg %p135
    // Predicated region
    $region9: #{tpu_custom_call.1} parent=5 // pred_check
      _
    $region10: #{tpu_custom_call.1} parent=5 // pred_check_branch
      %138 = sbr.rel (%p135) target = $region12
    $region11: #{tpu_custom_call.1} parent=5 // pred_region
      %s139 = ssub.s32 %s10, 1
      // Predicated region
      $region13: #{tpu_custom_call.1} parent=11 // pred_check
        %p140 = pneg %p57
      $region14: #{tpu_custom_call.1} parent=11 // pred_check_branch
        %142 = sbr.rel (%p140) target = $region16
      $region15: #{tpu_custom_call.1} parent=11 // pred_region
        _
      $region16: #{tpu_custom_call.1} parent=11 // pred_fallthru
        _
      // Predicated region
      $region17: #{tpu_custom_call.1} parent=11 // pred_check
        %p143 = pneg %p78
      $region18: #{tpu_custom_call.1} parent=11 // pred_check_branch
        %145 = sbr.rel (%p143) target = $region20
      $region19: #{tpu_custom_call.1} parent=11 // pred_region
        _
      $region20: #{tpu_custom_call.1} parent=11 // pred_fallthru
        _
      // Predicated region
      $region21: #{tpu_custom_call.1} parent=11 // pred_check
        %p146 = pneg %p99
      $region22: #{tpu_custom_call.1} parent=11 // pred_check_branch
        %148 = sbr.rel (%p146) target = $region24
      $region23: #{tpu_custom_call.1} parent=11 // pred_region
        _
      $region24: #{tpu_custom_call.1} parent=11 // pred_fallthru
        _
    $region12: #{tpu_custom_call.1} parent=5 // pred_fallthru
      _
    %p149 = scmp.lt.s32.totalorder %s10, 2
    // Predicated region
    $region25: #{tpu_custom_call.1} parent=5 // pred_check
      %p150 = pneg %p149
    $region26: #{tpu_custom_call.1} parent=5 // pred_check_branch
      %152 = sbr.rel (%p150) target = $region28
    $region27: #{tpu_custom_call.1} parent=5 // pred_region
      // Predicated region
      $region29: #{tpu_custom_call.1} parent=27 // pred_check
        %p153 = pneg %p30
      $region30: #{tpu_custom_call.1} parent=27 // pred_check_branch
        %155 = sbr.rel (%p153) target = $region32
      $region31: #{tpu_custom_call.1} parent=27 // pred_region
        %s156 = smul.u32 8, %s10
        %p157 = scmp.lt.s32.totalorder %s156, 15
        %s158 = scalar_select %p157, %s156, 15
        %s159 = smul.addr %s158, 8
        %s160 = scalar_lea.vmem %s0, %s159
        %s161 = smul.u32 8, %s10
      $region32: #{tpu_custom_call.1} parent=27 // pred_fallthru
        _
    $region28: #{tpu_custom_call.1} parent=5 // pred_fallthru
      _
    %p162 = scmp.le.s32.totalorder 1, %s10
    %p163 = scmp.lt.s32.totalorder %s10, 3
    %p164 = pnand %p162, %p163
    %p165 = pneg %p164
    // Predicated region
    $region33: #{tpu_custom_call.1} parent=5 // pred_check
      _
    $region34: #{tpu_custom_call.1} parent=5 // pred_check_branch
      %167 = sbr.rel (%p164) target = $region36
    $region35: #{tpu_custom_call.1} parent=5 // pred_region
      %s168 = ssub.s32 %s10, 1
      %s169 = smul.u32 8, %s15
      %p170 = scmp.lt.s32.totalorder %s169, 15
      %s171 = scalar_select %p170, %s169, 15
      %s172 = smul.addr %s171, 8
      %s173 = scalar_lea.vmem %s0, %s172
      %p174 = pneg %p36
      %p175 = pneg %p33
      %p176 = pneg %p57
      %p177 = pneg %p54
      %p178 = pneg %p78
      %p179 = pneg %p75
      %p180 = pneg %p99
      %p181 = pneg %p96
      %p182 = pneg %p125
      %p183 = pneg %p122
      %s184 = smul.u32 8, %s15
      %p185 = scmp.lt.s32.totalorder %s184, 15
      %s186 = scalar_select %p185, %s184, 15
      %s187 = smul.addr %s186, 8
      %s188 = scalar_lea.vmem %s4, %s187
      %s189 = smul.u32 8, %s15
      %p190 = scmp.lt.s32.totalorder %s189, 15
      %s191 = scalar_select %p190, %s189, 15
      %s192 = smul.addr %s191, 8
      %s193 = scalar_lea.vmem %s0, %s192
      %s194 = smul.u32 8, %s15
      %s195 = smul.u32 8, %s15
      %p196 = scmp.lt.s32.totalorder %s195, 15
      %s197 = scalar_select %p196, %s195, 15
      %s198 = smul.addr %s197, 8
      %s199 = scalar_lea.vmem %s4, %s198
      %s200 = smul.u32 8, %s15
      %v201 = vld [vmem:[%s193] sm:$0xff]
      %v202 = vld [vmem:[%s193 + $0x8] sm:$0xff]
      %v203 = vld [vmem:[%s193 + $0x10] sm:$0xff]
      %v204 = vld [vmem:[%s193 + $0x18] sm:$0xff]
      %v205 = vld [vmem:[%s193 + $0x20] sm:$0xff]
      %v206 = vld [vmem:[%s193 + $0x28] sm:$0xff]
      %v207 = vld [vmem:[%s193 + $0x30] sm:$0xff]
      %v208 = vld [vmem:[%s193 + $0x38] sm:$0xff]
      %209 = vadd.xlane.f32.xlu0 %v201
      %v210 = vpop.xlane.xlu0 %209
      %211 = vadd.xlane.f32.xlu0 %v202
      %v212 = vpop.xlane.xlu0 %211
      %213 = vadd.xlane.f32.xlu0 %v203
      %v214 = vpop.xlane.xlu0 %213
      %215 = vadd.xlane.f32.xlu0 %v204
      %v216 = vpop.xlane.xlu0 %215
      %217 = vadd.xlane.f32.xlu0 %v205
      %v218 = vpop.xlane.xlu0 %217
      %219 = vadd.xlane.f32.xlu0 %v206
      %v220 = vpop.xlane.xlu0 %219
      %221 = vadd.xlane.f32.xlu0 %v207
      %v222 = vpop.xlane.xlu0 %221
      %223 = vadd.xlane.f32.xlu0 %v208
      %v224 = vpop.xlane.xlu0 %223
      %v225 = vrcp.pop 128.0
      %v226 = vmul.f32 %v210, %v225
      %v227 = vmul.f32 %v212, %v225
      %v228 = vmul.f32 %v214, %v225
      %v229 = vmul.f32 %v216, %v225
      %v230 = vmul.f32 %v218, %v225
      %v231 = vmul.f32 %v220, %v225
      %v232 = vmul.f32 %v222, %v225
      %v233 = vmul.f32 %v224, %v225
      %v234 = vsub.f32 %v201, %v226
      %v235 = vsub.f32 %v202, %v227
      %v236 = vsub.f32 %v203, %v228
      %v237 = vsub.f32 %v204, %v229
      %v238 = vsub.f32 %v205, %v230
      %v239 = vsub.f32 %v206, %v231
      %v240 = vsub.f32 %v207, %v232
      %v241 = vsub.f32 %v208, %v233
      %v242 = vmul.f32 %v234, %v234
      %v243 = vmul.f32 %v235, %v235
      %v244 = vmul.f32 %v236, %v236
      %v245 = vmul.f32 %v237, %v237
      %v246 = vmul.f32 %v238, %v238
      %v247 = vmul.f32 %v239, %v239
      %v248 = vmul.f32 %v240, %v240
      %v249 = vmul.f32 %v241, %v241
      %250 = vadd.xlane.f32.xlu0 %v242
      %v251 = vpop.xlane.xlu0 %250
      %252 = vadd.xlane.f32.xlu0 %v243
      %v253 = vpop.xlane.xlu0 %252
      %254 = vadd.xlane.f32.xlu0 %v244
      %v255 = vpop.xlane.xlu0 %254
      %256 = vadd.xlane.f32.xlu0 %v245
      %v257 = vpop.xlane.xlu0 %256
      %258 = vadd.xlane.f32.xlu0 %v246
      %v259 = vpop.xlane.xlu0 %258
      %260 = vadd.xlane.f32.xlu0 %v247
      %v261 = vpop.xlane.xlu0 %260
      %262 = vadd.xlane.f32.xlu0 %v248
      %v263 = vpop.xlane.xlu0 %262
      %264 = vadd.xlane.f32.xlu0 %v249
      %v265 = vpop.xlane.xlu0 %264
      %v266 = vmul.f32 %v251, %v225
      %v267 = vmul.f32 %v253, %v225
      %v268 = vmul.f32 %v255, %v225
      %v269 = vmul.f32 %v257, %v225
      %v270 = vmul.f32 %v259, %v225
      %v271 = vmul.f32 %v261, %v225
      %v272 = vmul.f32 %v263, %v225
      %v273 = vmul.f32 %v265, %v225
      %v274 = vadd.f32 %v266, 1e-05
      %v275 = vadd.f32 %v267, 1e-05
      %v276 = vadd.f32 %v268, 1e-05
      %v277 = vadd.f32 %v269, 1e-05
      %v278 = vadd.f32 %v270, 1e-05
      %v279 = vadd.f32 %v271, 1e-05
      %v280 = vadd.f32 %v272, 1e-05
      %v281 = vadd.f32 %v273, 1e-05
      %v282 = vrsqrt.pop %v274
      %v283 = vrsqrt.pop %v275
      %v284 = vrsqrt.pop %v276
      %v285 = vrsqrt.pop %v277
      %v286 = vrsqrt.pop %v278
      %v287 = vrsqrt.pop %v279
      %v288 = vrsqrt.pop %v280
      %v289 = vrsqrt.pop %v281
      %v290 = vmul.f32 %v234, %v282
      %v291 = vmul.f32 %v235, %v283
      %v292 = vmul.f32 %v236, %v284
      %v293 = vmul.f32 %v237, %v285
      %v294 = vmul.f32 %v238, %v286
      %v295 = vmul.f32 %v239, %v287
      %v296 = vmul.f32 %v240, %v288
      %v297 = vmul.f32 %v241, %v289
      %v298 = vld [vmem:[%s1] sm:$0x1]
      %v300 = vlaneseq
      %v301 = vshrl.u32 %v300, 7
      %v302 = vsub.s32 0, %v301
      %v303 = vrot.slane %v298, %v302
      %v305 = vmul.f32 %v290, %v303
      %v306 = vmul.f32 %v291, %v303
      %v307 = vmul.f32 %v292, %v303
      %v308 = vmul.f32 %v293, %v303
      %v309 = vmul.f32 %v294, %v303
      %v310 = vmul.f32 %v295, %v303
      %v311 = vmul.f32 %v296, %v303
      %v312 = vmul.f32 %v297, %v303
      %v313 = vld [vmem:[%s2] sm:$0x1]
      %v315 = vlaneseq
      %v316 = vshrl.u32 %v315, 7
      %v317 = vsub.s32 0, %v316
      %v318 = vrot.slane %v313, %v317
      %v320 = vadd.f32 %v305, %v318
      %v321 = vadd.f32 %v306, %v318
      %v322 = vadd.f32 %v307, %v318
      %v323 = vadd.f32 %v308, %v318
      %v324 = vadd.f32 %v309, %v318
      %v325 = vadd.f32 %v310, %v318
      %v326 = vadd.f32 %v311, %v318
      %v327 = vadd.f32 %v312, %v318
      %v328 = vld [vmem:[%s3] sm:$0xff]
      %v329 = vld [vmem:[%s3 + $0x8] sm:$0xff]
      %v330 = vld [vmem:[%s3 + $0x10] sm:$0xff]
      %v331 = vld [vmem:[%s3 + $0x18] sm:$0xff]
      %v332 = vld [vmem:[%s3 + $0x20] sm:$0xff]
      %v333 = vld [vmem:[%s3 + $0x28] sm:$0xff]
      %v334 = vld [vmem:[%s3 + $0x30] sm:$0xff]
      %v335 = vld [vmem:[%s3 + $0x38] sm:$0xff]
      %v336 = vld [vmem:[%s3 + $0x40] sm:$0xff]
      %v337 = vld [vmem:[%s3 + $0x48] sm:$0xff]
      %v338 = vld [vmem:[%s3 + $0x50] sm:$0xff]
      %v339 = vld [vmem:[%s3 + $0x58] sm:$0xff]
      %v340 = vld [vmem:[%s3 + $0x60] sm:$0xff]
      %v341 = vld [vmem:[%s3 + $0x68] sm:$0xff]
      %v342 = vld [vmem:[%s3 + $0x70] sm:$0xff]
      %v343 = vld [vmem:[%s3 + $0x78] sm:$0xff]
      %344 = vmatprep.subr.mxu0 0.0
      %345 = vmatpush1.msra.mxu0 %v328
      %346 = vmatprep.subr.mxu0 0.0
      %347 = vmatpush1.msra.mxu0 %v329
      %348 = vmatprep.subr.mxu0 0.0
      %349 = vmatpush1.msra.mxu0 %v330
      %350 = vmatprep.subr.mxu0 0.0
      %351 = vmatpush1.msra.mxu0 %v331
      %352 = vmatprep.subr.mxu0 0.0
      %353 = vmatpush1.msra.mxu0 %v332
      %354 = vmatprep.subr.mxu0 0.0
      %355 = vmatpush1.msra.mxu0 %v333
      %356 = vmatprep.subr.mxu0 0.0
      %357 = vmatpush1.msra.mxu0 %v334
      %358 = vmatprep.subr.mxu0 0.0
      %359 = vmatpush1.msra.mxu0 %v335
      %360 = vmatprep.subr.mxu0 0.0
      %361 = vmatpush1.msra.mxu0 %v336
      %362 = vmatprep.subr.mxu0 0.0
      %363 = vmatpush1.msra.mxu0 %v337
      %364 = vmatprep.subr.mxu0 0.0
      %365 = vmatpush1.msra.mxu0 %v338
      %366 = vmatprep.subr.mxu0 0.0
      %367 = vmatpush1.msra.mxu0 %v339
      %368 = vmatprep.subr.mxu0 0.0
      %369 = vmatpush1.msra.mxu0 %v340
      %370 = vmatprep.subr.mxu0 0.0
      %371 = vmatpush1.msra.mxu0 %v341
      %372 = vmatprep.subr.mxu0 0.0
      %373 = vmatpush1.msra.mxu0 %v342
      %374 = vmatprep.subr.mxu0 0.0
      %375 = vmatpush1.msra.mxu0 %v343
      %376 = vmatprep.subr.mxu0 0.0
      %377 = vmatpush1.msra.mxu0 0.0
      %378 = vmatprep.subr.mxu0 0.0
      %379 = vmatpush1.msra.mxu0 0.0
      %380 = vmatprep.subr.mxu0 0.0
      %381 = vmatpush1.msra.mxu0 0.0
      %382 = vmatprep.subr.mxu0 0.0
      %383 = vmatpush1.msra.mxu0 0.0
      %384 = vmatprep.subr.mxu0 0.0
      %385 = vmatpush1.msra.mxu0 0.0
      %386 = vmatprep.subr.mxu0 0.0
      %387 = vmatpush1.msra.mxu0 0.0
      %388 = vmatprep.subr.mxu0 0.0
      %389 = vmatpush1.msra.mxu0 0.0
      %390 = vmatprep.subr.mxu0 0.0
      %391 = vmatpush1.msra.mxu0 0.0
      %392 = vmatprep.subr.mxu0 0.0
      %393 = vmatpush1.msra.mxu0 0.0
      %394 = vmatprep.subr.mxu0 0.0
      %395 = vmatpush1.msra.mxu0 0.0
      %396 = vmatprep.subr.mxu0 0.0
      %397 = vmatpush1.msra.mxu0 0.0
      %398 = vmatprep.subr.mxu0 0.0
      %399 = vmatpush1.msra.mxu0 0.0
      %400 = vmatprep.subr.mxu0 0.0
      %401 = vmatpush1.msra.mxu0 0.0
      %402 = vmatprep.subr.mxu0 0.0
      %403 = vmatpush1.msra.mxu0 0.0
      %404 = vmatprep.subr.mxu0 0.0
      %405 = vmatpush1.msra.mxu0 0.0
      %406 = vmatprep.subr.mxu0 0.0
      %407 = vmatpush1.msra.mxu0 0.0
      %408 = vmatprep.mubr.f32.mxu0 0.0
      %409 = vmatmul.mubr.f32.gmra.mrb[0].mxu0 %v320
      %v410 = vpop.f32.mrb[0].mxu0
      %v411 = vadd.f32 0.0, %v410
      %v412 = vpop.f32.mrb[0].mxu0
      %413 = vmatprep.mubr.f32.mxu0 0.0
      %414 = vmatmul.mubr.f32.gmra.mrb[0].mxu0 %v321
      %v415 = vpop.f32.mrb[0].mxu0
      %v416 = vadd.f32 0.0, %v415
      %v417 = vpop.f32.mrb[0].mxu0
      %418 = vmatprep.mubr.f32.mxu0 0.0
      %419 = vmatmul.mubr.f32.gmra.mrb[0].mxu0 %v322
      %v420 = vpop.f32.mrb[0].mxu0
      %v421 = vadd.f32 0.0, %v420
      %v422 = vpop.f32.mrb[0].mxu0
      %423 = vmatprep.mubr.f32.mxu0 0.0
      %424 = vmatmul.mubr.f32.gmra.mrb[0].mxu0 %v323
      %v425 = vpop.f32.mrb[0].mxu0
      %v426 = vadd.f32 0.0, %v425
      %v427 = vpop.f32.mrb[0].mxu0
      %428 = vmatprep.mubr.f32.mxu0 0.0
      %429 = vmatmul.mubr.f32.gmra.mrb[0].mxu0 %v324
      %v430 = vpop.f32.mrb[0].mxu0
      %v431 = vadd.f32 0.0, %v430
      %v432 = vpop.f32.mrb[0].mxu0
      %433 = vmatprep.mubr.f32.mxu0 0.0
      %434 = vmatmul.mubr.f32.gmra.mrb[0].mxu0 %v325
      %v435 = vpop.f32.mrb[0].mxu0
      %v436 = vadd.f32 0.0, %v435
      %v437 = vpop.f32.mrb[0].mxu0
      %438 = vmatprep.mubr.f32.mxu0 0.0
      %439 = vmatmul.mubr.f32.gmra.mrb[0].mxu0 %v326
      %v440 = vpop.f32.mrb[0].mxu0
      %v441 = vadd.f32 0.0, %v440
      %v442 = vpop.f32.mrb[0].mxu0
      %443 = vmatprep.mubr.f32.mxu0 0.0
      %444 = vmatmul.mubr.f32.gmra.mrb[0].mxu0 %v327
      %v445 = vpop.f32.mrb[0].mxu0
      %v446 = vadd.f32 0.0, %v445
      %v447 = vpop.f32.mrb[0].mxu0
      %448 = vdwg.mxu0
      %vm449 = vcmask 261120
      %450 = vst.msk [vmem:[%s199] sm:$0xff] %vm449, %v411
      %451 = vst.msk [vmem:[%s199 + $0x8] sm:$0xff] %vm449, %v416
      %452 = vst.msk [vmem:[%s199 + $0x10] sm:$0xff] %vm449, %v421
      %453 = vst.msk [vmem:[%s199 + $0x18] sm:$0xff] %vm449, %v426
      %454 = vst.msk [vmem:[%s199 + $0x20] sm:$0xff] %vm449, %v431
      %455 = vst.msk [vmem:[%s199 + $0x28] sm:$0xff] %vm449, %v436
      %456 = vst.msk [vmem:[%s199 + $0x30] sm:$0xff] %vm449, %v441
      %457 = vst.msk [vmem:[%s199 + $0x38] sm:$0xff] %vm449, %v446
      %s458 = smul.u32 8, %s15
      %p459 = scmp.lt.s32.totalorder %s458, 15
      %s460 = scalar_select %p459, %s458, 15
      %s461 = smul.addr %s460, 8
      %s462 = scalar_lea.vmem %s4, %s461
      // Predicated region
      $region37: #{tpu_custom_call.1} parent=35 // pred_check
        %p463 = pneg %p122
      $region38: #{tpu_custom_call.1} parent=35 // pred_check_branch
        %465 = sbr.rel (%p463) target = $region40
      $region39: #{tpu_custom_call.1} parent=35 // pred_region
        %s466 = smul.u32 8, %s15
      $region40: #{tpu_custom_call.1} parent=35 // pred_fallthru
        _
    $region36: #{tpu_custom_call.1} parent=5 // pred_fallthru
      _
    %p467 = scmp.le.s32.totalorder 2, %s10
    // Predicated region
    $region41: #{tpu_custom_call.1} parent=5 // pred_check
      %p468 = pneg %p467
    $region42: #{tpu_custom_call.1} parent=5 // pred_check_branch
      %470 = sbr.rel (%p468) target = $region44
    $region43: #{tpu_custom_call.1} parent=5 // pred_region
      %s471 = ssub.s32 %s10, 2
      // Predicated region
      $region45: #{tpu_custom_call.1} parent=43 // pred_check
        %p472 = pneg %p128
      $region46: #{tpu_custom_call.1} parent=43 // pred_check_branch
        %474 = sbr.rel (%p472) target = $region48
      $region47: #{tpu_custom_call.1} parent=43 // pred_region
        %s475 = smul.u32 8, %s16
        %p476 = scmp.lt.s32.totalorder %s475, 15
        %s477 = scalar_select %p476, %s475, 15
        %s478 = smul.addr %s477, 8
        %s479 = scalar_lea.vmem %s4, %s478
      $region48: #{tpu_custom_call.1} parent=43 // pred_fallthru
        _
    $region44: #{tpu_custom_call.1} parent=5 // pred_fallthru
      _
  $region6: #{tpu_custom_call.1} parent=0 // loop_footer
    %s14 = sadd.s32 1, %s10
  $region7: #{tpu_custom_call.1} parent=0 // loop_footer_branch
    %9 = sbr.rel target = $region3
  $region8: #{tpu_custom_call.1} parent=0 // loop_exit
    _

</llo_original>
